<compile_context>
chip_gen: v5e
topology: v5e:2x2
jax: 0.10.0
libtpu: 0.0.40
codegen_flags: <defaults>
</compile_context>

<pallas_src>
import functools
import math

import jax
import jax.numpy as jnp
from jax import lax
from jax.experimental import pallas as pl
from jax.experimental.pallas import tpu as pltpu


def make_pe_table(d_model: int, max_len: int = 1024, dtype=jnp.float32):
    """Deterministic sinusoidal table, identical math to the PyTorch __init__."""
    position = jnp.arange(max_len, dtype=jnp.float32)[:, None]              # (max_len, 1)
    div_term = jnp.exp(
        jnp.arange(0, d_model, 2, dtype=jnp.float32) * (-math.log(10000.0) / d_model)
    )                                                                        # (d_model//2,)
    ang = position * div_term                                                # (max_len, d_model//2)
    pe = jnp.zeros((max_len, d_model), dtype=jnp.float32)
    pe = pe.at[:, 0::2].set(jnp.sin(ang))
    pe = pe.at[:, 1::2].set(jnp.cos(ang))
    return pe.astype(dtype)


# ---------------------------------------------------------------------------
# Kernels
# ---------------------------------------------------------------------------
def _add_pe_kernel(x_ref, pe_ref, o_ref, *, batch):
    # x_ref/o_ref: (tS, B*D) lane-dense; pe_ref: (tS, D)
    # Replicate pe along lanes once per block (columns b*D+d <- pe[:, d]).
    o_ref[...] = x_ref[...] + jnp.tile(pe_ref[...], (1, batch))


def _hash_keep_mask(shape, seed_u32, row_offset_u32, p):
    """Stateless per-element keep mask: murmur3 finalizer of (seed, global idx),
    integer-thresholded so keep-probability = 1 - p (no float uniform needed)."""
    row = lax.broadcasted_iota(jnp.int32, shape, 0).astype(jnp.uint32)
    col = lax.broadcasted_iota(jnp.int32, shape, 1).astype(jnp.uint32)
    h = (row + row_offset_u32) * jnp.uint32(shape[1]) + col
    h = h ^ (seed_u32 * jnp.uint32(0x9E3779B9))
    h = h ^ (h >> jnp.uint32(16))
    h = h * jnp.uint32(0x85EBCA6B)
    h = h ^ (h >> jnp.uint32(13))
    h = h * jnp.uint32(0xC2B2AE35)
    h = h ^ (h >> jnp.uint32(16))
    threshold = jnp.uint32(min(int(p * (2.0 ** 32)), 2 ** 32 - 1))
    return h >= threshold


def _add_pe_dropout_kernel(seed_ref, x_ref, pe_ref, o_ref, *, batch, p, tile_s):
    # TODO(synk): cannot reproduce torch's RNG stream bit-for-bit; semantics
    # (drop prob p, survivors scaled by 1/(1-p)) are reproduced instead.
    y = x_ref[...] + jnp.tile(pe_ref[...], (1, batch))
    seed_u32 = seed_ref[0].astype(jnp.uint32)
    row_off = (pl.program_id(0) * tile_s).astype(jnp.uint32)
    keep = _hash_keep_mask(y.shape, seed_u32, row_off, p)
    scale = 1.0 / (1.0 - p)                                   # python float constant
    gate = jnp.where(keep, jnp.asarray(scale, y.dtype), jnp.asarray(0.0, y.dtype))
    o_ref[...] = (y * gate).astype(o_ref.dtype)


# ---------------------------------------------------------------------------
# Wrapper
# ---------------------------------------------------------------------------
_VMEM_LIMIT_BYTES = 48 * 1024 * 1024     # safe on v7x (64 MiB physical), raises v5e's 16 MiB default
_VMEM_TILE_BUDGET = 40 * 1024 * 1024     # budget used to size the tile (leaves headroom)


def _pick_tile_s(S, row_bytes, pe_row_bytes, budget_bytes):
    """Largest tile over the sequence axis that fits the VMEM budget:
    double-buffered x + out blocks (4 * tS * row_bytes) + double-buffered pe block."""
    per_row = 4 * row_bytes + 2 * pe_row_bytes
    tS = budget_bytes // max(per_row, 1)
    tS = max(8, (tS // 8) * 8)           # sublane-aligned
    return S if tS >= S else int(tS)     # tS == S keeps block == full dim (always legal)


def positional_encoding(x, pe, *, training=False, p=0.1, seed=0):
    """x: (S, B, D); pe: (max_len, D); returns (S, B, D) = dropout(x + pe[:S])."""
    S, B, D = x.shape
    assert pe.shape[0] >= S and pe.shape[1] == D
    assert 0.0 <= p < 1.0, "dropout p must be in [0, 1)"

    dtype = x.dtype
    itemsize = jnp.dtype(dtype).itemsize
    pe_s = pe[:S].astype(dtype)          # slice + pre-cast once (no in-kernel promotion)
    x2d = x.reshape(S, B * D)            # lane-dense view; free for row-major (S, B, D)

    tS = _pick_tile_s(S, B * D * itemsize, D * itemsize, _VMEM_TILE_BUDGET)
    grid = (pl.cdiv(S, tS),)

    x_spec = pl.BlockSpec((tS, B * D), lambda i: (i, 0))
    pe_spec = pl.BlockSpec((tS, D), lambda i: (i, 0))
    out_spec = pl.BlockSpec((tS, B * D), lambda i: (i, 0))
    out_shape = jax.ShapeDtypeStruct((S, B * D), dtype)

    cost = pl.CostEstimate(
        flops=S * B * D,
        transcendentals=0,
        bytes_accessed=2 * S * B * D * itemsize + S * D * itemsize,
    )
    cparams = pltpu.CompilerParams(
        dimension_semantics=("parallel",),      # hash-based dropout is order-independent
        vmem_limit_bytes=_VMEM_LIMIT_BYTES,
    )

    if (not training) or p == 0.0:
        # Eval-mode dropout is the identity (matches nn.Dropout.eval()).
        kern = functools.partial(_add_pe_kernel, batch=B)
        y2d = pl.pallas_call(
            kern,
            out_shape=out_shape,
            grid=grid,
            in_specs=[x_spec, pe_spec],
            out_specs=out_spec,
            compiler_params=cparams,
            cost_estimate=cost,
        )(x2d, pe_s)
    else:
        seed_arr = jnp.array([seed], dtype=jnp.int32)
        seed_spec = pl.BlockSpec(memory_space=pltpu.MemorySpace.SMEM)
        kern = functools.partial(_add_pe_dropout_kernel, batch=B, p=p, tile_s=tS)
        y2d = pl.pallas_call(
            kern,
            out_shape=out_shape,
            grid=grid,
            in_specs=[seed_spec, x_spec, pe_spec],
            out_specs=out_spec,
            compiler_params=cparams,
            cost_estimate=cost,
        )(seed_arr, x2d, pe_s)

    return y2d.reshape(S, B, D)


# ---------------------------------------------------------------------------
# Demo / check
# ---------------------------------------------------------------------------
if __name__ == "__main__":
    S, B, D = 8, 2, 32          # seq_len, batch, d_model
    MAX_LEN = 1024

    key = jax.random.PRNGKey(0)
    x = jax.random.normal(key, (S, B, D), dtype=jnp.float32)
    pe = make_pe_table(D, MAX_LEN)

    # Eval mode: dropout is identity -> exact reference check.
    y_eval = jax.block_until_ready(positional_encoding(x, pe, training=False))
    y_ref = x + pe[:S][:, None, :]
    assert y_eval.shape == (S, B, D)
    assert jnp.allclose(y_eval, y_ref, atol=1e-6, rtol=1e-6), "eval-mode mismatch"

    # Training mode: every output element must be either 0 (dropped) or the
    # reference value scaled by 1/(1-p) (kept).
    p = 0.1
    y_train = jax.block_until_ready(positional_encoding(x, pe, training=True, p=p, seed=0))
    assert y_train.shape == (S, B, D)
    scale = 1.0 / (1.0 - p)
    ok = jnp.isclose(y_train, 0.0, atol=1e-6) | jnp.isclose(
        y_train, y_ref * scale, rtol=1e-5, atol=1e-6
    )
    assert bool(jnp.all(ok)), "train-mode output must be 0 or scaled (x + pe)"

    print("KERNEL_OK")
</pallas_src>

<mosaic_0001>
module attributes {stable_mosaic.version = 11 : i64} {
  func.func @_add_pe_kernel(%arg0: i32, %arg1: memref<8x64xf32, #tpu.memory_space<vmem>>, %arg2: memref<8x32xf32, #tpu.memory_space<vmem>>, %arg3: memref<8x64xf32, #tpu.memory_space<vmem>>) attributes {dimension_semantics = [#tpu.dimension_semantics<parallel>], iteration_bounds = array<i64: 1>, scalar_prefetch = 0 : i64, scratch_operands = 0 : i64, tpu.core_type = #tpu.core_type<tc>, window_params = [{transform_indices = @transform_0, window_bounds = array<i64: 8, 64>}, {transform_indices = @transform_1, window_bounds = array<i64: 8, 32>}, {transform_indices = @transform_2, window_bounds = array<i64: 8, 64>}]} {
    %c0 = arith.constant 0 : index
    %c0_0 = arith.constant 0 : index
    %0 = vector.load %arg1[%c0, %c0_0] : memref<8x64xf32, #tpu.memory_space<vmem>>, vector<8x64xf32>
    %c0_1 = arith.constant 0 : index
    %c0_2 = arith.constant 0 : index
    %1 = vector.load %arg2[%c0_1, %c0_2] : memref<8x32xf32, #tpu.memory_space<vmem>>, vector<8x32xf32>
    %2 = tpu.concatenate %1, %1 in 1 : vector<8x32xf32>, vector<8x32xf32> -> vector<8x64xf32>
    %3 = arith.addf %0, %2 : vector<8x64xf32>
    %c0_3 = arith.constant 0 : index
    %c0_4 = arith.constant 0 : index
    %4 = vector.load %arg3[%c0_3, %c0_4] : memref<8x64xf32, #tpu.memory_space<vmem>>, vector<8x64xf32>
    tpu.vector_store %arg3[%c0_3, %c0_4], %3 {strides = array<i32>} : memref<8x64xf32, #tpu.memory_space<vmem>>, vector<8x64xf32>,
    return
  }
  func.func @transform_0(%arg0: i32) -> (i32, i32) {
    %c0_i32 = arith.constant 0 : i32
    %c0_i32_0 = arith.constant 0 : i32
    return %arg0, %c0_i32 : i32, i32
  }
  func.func @transform_1(%arg0: i32) -> (i32, i32) {
    %c0_i32 = arith.constant 0 : i32
    %c0_i32_0 = arith.constant 0 : i32
    return %arg0, %c0_i32 : i32, i32
  }
  func.func @transform_2(%arg0: i32) -> (i32, i32) {
    %c0_i32 = arith.constant 0 : i32
    %c0_i32_0 = arith.constant 0 : i32
    return %arg0, %c0_i32 : i32, i32
  }
}

</mosaic_0001>

<llo_original>
// kernel: tpu_custom_call.1
$region0: #{tpu_custom_call.1}
  #allocation0 [shape = 'u32[]', space=smem, size = 0x4, offset = 0x4, fixed_abs, tag = 'smem constant byte address 0x4 - core index']
  #allocation1 [shape = 'u32[72,128]{1,0:T(1,128)}', space=vmem, size = 0x9000, scoped, tag = 'internal scratch']
  %s0 = inlined_call_operand.hbm [shape: f32[8,64], index: 0, kind: input, shape index: {}]
  %s1 = inlined_call_operand.hbm [shape: f32[8,32], index: 1, kind: input, shape index: {}]
  %s2 = inlined_call_operand.hbm [shape: f32[8,64], index: 2, kind: output, shape index: {}]
  %s3 = sld [smem:[#allocation0]]
  $region26: #{tpu_custom_call.1} parent=0
    _
  %s5 = ssub.s32 1, %s3
  %s6 = scalar_select 0, %s5, %s3
  $region1: #{tpu_custom_call.1} parent=0
    #allocation2 [shape = 'u8[4096]{0}', space=vmem, size = 0x1000, scoped, tag = 'input window, operand 0, single buffered']
    #allocation3 [shape = 's32[1]{0}', space=sflag, size = 0x4, scoped, tag = 'scoped memory for tpu_custom_call.1']
    #allocation4 [shape = 's32[1]{0}', space=sflag, size = 0x4, scoped, tag = 'scoped memory for tpu_custom_call.1']
    #allocation5 [shape = 'u8[4096]{0}', space=vmem, size = 0x1000, scoped, tag = 'input window, operand 1, single buffered']
    #allocation6 [shape = 's32[1]{0}', space=sflag, size = 0x4, scoped, tag = 'scoped memory for tpu_custom_call.1']
    #allocation7 [shape = 'u8[4096]{0}', space=vmem, size = 0x1000, scoped, tag = 'output window, operand 0, single buffered']
    %7 = vsyncpa [#allocation3], 0
    %8 = vsyncpa [#allocation6], 0
    %9 = vsyncpa [#allocation4], 0
    // Predicated region
    $region2: #{tpu_custom_call.1} parent=1 // pred_check
      _
    $region3: #{tpu_custom_call.1} parent=1 // pred_check_branch
      %11 = sbr.rel (0) target = $region5
    $region4: #{tpu_custom_call.1} parent=1 // pred_region
      %13 = vsyncadd [#allocation3], 0
      %s15 = sshll.u32 %s0, 4
      %s16 = int_to_ptr.hbm [resolvable:$true] %s15
      %s17 = sshll.u32 [#allocation2], 4
      %s18 = int_to_ptr.vmem [resolvable:$true] %s17
      %20 = dma.hbm_to_vmem [thread:$0]  %s16, 128, %s18, [#allocation3]
    $region5: #{tpu_custom_call.1} parent=1 // pred_fallthru
      _
    // Predicated region
    $region6: #{tpu_custom_call.1} parent=1 // pred_check
      _
    $region7: #{tpu_custom_call.1} parent=1 // pred_check_branch
      %22 = sbr.rel (0) target = $region9
    $region8: #{tpu_custom_call.1} parent=1 // pred_region
      %24 = vsyncadd [#allocation6], 0
      %s26 = sshll.u32 %s1, 4
      %s27 = int_to_ptr.hbm [resolvable:$true] %s26
      %s28 = sshll.u32 [#allocation5], 4
      %s29 = int_to_ptr.vmem [resolvable:$true] %s28
      %31 = dma.hbm_to_vmem [thread:$0]  %s27, 128, %s29, [#allocation6]
    $region9: #{tpu_custom_call.1} parent=1 // pred_fallthru
      _
    // Predicated region
    $region10: #{tpu_custom_call.1} parent=1 // pred_check
      _
    $region11: #{tpu_custom_call.1} parent=1 // pred_check_branch
      %33 = sbr.rel (0) target = $region13
    $region12: #{tpu_custom_call.1} parent=1 // pred_region
      %35 = dma.done [#allocation3], 128
    $region13: #{tpu_custom_call.1} parent=1 // pred_fallthru
      _
    // Predicated region
    $region14: #{tpu_custom_call.1} parent=1 // pred_check
      _
    $region15: #{tpu_custom_call.1} parent=1 // pred_check_branch
      %37 = sbr.rel (0) target = $region17
    $region16: #{tpu_custom_call.1} parent=1 // pred_region
      %39 = dma.done [#allocation6], 128
    $region17: #{tpu_custom_call.1} parent=1 // pred_fallthru
      _
    %v40 = vld [vmem:[#allocation2] sm:$0xff]
    %v41 = vld [vmem:[#allocation5] sm:$0xff]
    %43 = vrot.lane.b32.xlu0 %v41, 32
    %v44 = vpop.permute.xlu0 %43
    %vm46 = vcmask 261120
    %v47 = vsel %vm46, %v41, %v44
    %v48 = vadd.f32 %v40, %v47
    %vm49 = vcmask 523264
    %50 = vst.msk [vmem:[#allocation7] sm:$0xff] %vm49, %v48
    // Predicated region
    $region18: #{tpu_custom_call.1} parent=1 // pred_check
      _
    $region19: #{tpu_custom_call.1} parent=1 // pred_check_branch
      %52 = sbr.rel (0) target = $region21
    $region20: #{tpu_custom_call.1} parent=1 // pred_region
      %54 = vsyncadd [#allocation4], 0
      %s56 = sshll.u32 [#allocation7], 4
      %s57 = int_to_ptr.vmem [resolvable:$true] %s56
      %s58 = sshll.u32 %s2, 4
      %s59 = int_to_ptr.hbm [resolvable:$true] %s58
      %61 = dma.vmem_to_hbm [thread:$0]  %s57, 128, %s59, [#allocation4]
    $region21: #{tpu_custom_call.1} parent=1 // pred_fallthru
      _
    // Predicated region
    $region22: #{tpu_custom_call.1} parent=1 // pred_check
      _
    $region23: #{tpu_custom_call.1} parent=1 // pred_check_branch
      %63 = sbr.rel (0) target = $region25
    $region24: #{tpu_custom_call.1} parent=1 // pred_region
      %65 = dma.done [#allocation4], 128
    $region25: #{tpu_custom_call.1} parent=1 // pred_fallthru
      _
    %66 = vsyncpa [#allocation3], 1
    %67 = vsyncpa [#allocation6], 1
    %68 = vsyncpa [#allocation4], 1

</llo_original>
